<compile_context>
chip_gen: v7x
topology: tpu7x:2x2x1
jax: 0.10.0
libtpu: 0.0.40
codegen_flags: <defaults>
</compile_context>

<pallas_src>
import functools
import math

import jax
import jax.numpy as jnp
from jax.experimental import pallas as pl
from jax.experimental.pallas import tpu as pltpu

MXU_DTYPE = jnp.bfloat16          # bf16 MXU operands, f32 accumulation
LANE = 128


def _round_up(x, m):
    return (x + m - 1) // m * m


# ---------------------------------------------------------------------------
# Fused kernel: one MXU dot (m, 16*Cin)@(16*Cin, TN) + InstanceNorm2d
# (affine=False, biased variance) + LeakyReLU(0.2).  One grid step is one
# (batch sample, Cout tile); the full spatial extent is resident so the
# per-(n, c) InstanceNorm statistics are exact.
# ---------------------------------------------------------------------------
def _conv_block_kernel(lhs_ref, w_ref, o_ref, *, m, eps, negative_slope):
    # Single MXU dot with K = 16*Cin (4x deeper contraction than per-tap dots).
    acc = jnp.dot(lhs_ref[0], w_ref[...],
                  preferred_element_type=jnp.float32)        # (m, TN) f32

    # InstanceNorm2d: per-channel stats over the spatial axis (single pass).
    inv_m = 1.0 / m
    mean = jnp.sum(acc, axis=0, keepdims=True) * inv_m       # (1, TN)
    mean_sq = jnp.sum(acc * acc, axis=0, keepdims=True) * inv_m
    var = jnp.maximum(mean_sq - mean * mean, 0.0)             # clamp cancellation
    scale = jax.lax.rsqrt(var + eps)
    shift = -mean * scale
    y = acc * scale + shift                                    # one fused VPU pass

    # LeakyReLU(0.2) as a single vmax (valid for 0 < slope < 1).
    y = jnp.maximum(y, negative_slope * y)
    o_ref[0] = y.astype(o_ref.dtype)


# ---------------------------------------------------------------------------
# Wrapper-side layout transforms (all in XLA, before the kernel).
# For chained ConvBlocks one would keep activations NHWC between layers so
# only pad + space-to-depth remain here.
# ---------------------------------------------------------------------------
def _extract_patches(x_nchw, dtype):
    """NCHW -> (N, Ho*Wo, 16*Cin) patch matrix for the k=4, s=2, p=1 conv.

    Space-to-depth(2) of the zero-padded NHWC input, then the four 2x2 tap
    windows concatenated on the channel axis.  K ordering: (di, dj, p, q, c).
    """
    n, cin, h, w = x_nchw.shape
    ho, wo = h // 2, w // 2
    x = jnp.transpose(x_nchw, (0, 2, 3, 1))                    # NHWC
    x = jnp.pad(x, ((0, 0), (1, 1), (1, 1), (0, 0)))
    x = x.reshape(n, ho + 1, 2, wo + 1, 2, cin)                 # (n,r,p,cc,q,c)
    x = jnp.transpose(x, (0, 1, 3, 2, 4, 5)).reshape(n, ho + 1, wo + 1, 4 * cin)
    taps = [x[:, di:di + ho, dj:dj + wo, :]
            for di in range(2) for dj in range(2)]
    lhs = jnp.concatenate(taps, axis=-1)                        # (n, ho, wo, 16*cin)
    return lhs.reshape(n, ho * wo, 16 * cin).astype(dtype)


def _pack_weights(w_oihw, coutp, dtype):
    """OIHW (Cout, Cin, 4, 4) -> (16*Cin, Cout_pad) matching the LHS K order."""
    cout, cin, kh, kw = w_oihw.shape
    assert kh == 4 and kw == 4
    wt = w_oihw.reshape(cout, cin, 2, 2, 2, 2)                  # (co,ci,di,p,dj,q)
    wt = jnp.transpose(wt, (2, 4, 3, 5, 1, 0))                  # (di,dj,p,q,ci,co)
    wt = wt.reshape(16 * cin, cout)
    wt = jnp.pad(wt, ((0, 0), (0, coutp - cout)))
    return wt.astype(dtype)


def conv_block_forward(w_oihw, b, x_nchw, *, mxu_dtype=MXU_DTYPE,
                       eps=1e-5, negative_slope=0.2):
    """ConvBlock: Conv2d(k=4, s=2, p=1) -> InstanceNorm2d -> LeakyReLU(0.2).

    x_nchw: (N, Cin, H, W) float32 with even H, W.  Returns (N, Cout, H/2, W/2).
    """
    n, cin, h, w = x_nchw.shape
    cout = w_oihw.shape[0]
    assert h % 2 == 0 and w % 2 == 0, "k=4, s=2, p=1 conv expects even H, W"
    ho, wo = h // 2, w // 2
    m = ho * wo
    k16 = 16 * cin

    # Cout tile: 256 fills the v6e/v7x MXU N dim; 128 (one lane width) for
    # small Cout (and is the natural choice on v5e's 128-wide MXUs).
    tn = 256 if cout > 128 else 128
    coutp = _round_up(cout, tn)
    n_ct = coutp // tn

    lhs = _extract_patches(x_nchw, mxu_dtype)                   # bf16 DMA path
    w_packed = _pack_weights(w_oihw, coutp, mxu_dtype)
    # Conv bias is dropped: InstanceNorm (affine=False) removes the per-channel
    # mean, so a constant per-channel bias cancels exactly (the reference keeps
    # it; results are identical).
    del b

    # Generation-aware VMEM budget (never clamped below actual per-step need).
    bf = jnp.dtype(mxu_dtype).itemsize
    need = (2 * m * k16 * bf            # double-buffered LHS block
            + 2 * k16 * tn * bf         # weight block (constant index)
            + 2 * m * tn * bf           # double-buffered bf16 output block
            + 3 * m * tn * 4)           # f32 acc + temporaries headroom
    try:
        cap = int(0.85 * pltpu.get_tpu_info().vmem_capacity_bytes)
    except Exception:                    # pragma: no cover - defensive fallback
        cap = 48 * 1024 * 1024           # safe under v7x's 64 MiB physical VMEM
    vmem_limit = int(min(max(3 * need, 8 * 1024 * 1024), cap))

    kernel = functools.partial(_conv_block_kernel, m=m, eps=eps,
                               negative_slope=negative_slope)

    out = pl.pallas_call(
        kernel,
        out_shape=jax.ShapeDtypeStruct((n, m, coutp), mxu_dtype),
        grid_spec=pltpu.PrefetchScalarGridSpec(
            num_scalar_prefetch=0,
            grid=(n, n_ct),
            in_specs=[
                pl.BlockSpec((1, m, k16), lambda i, j: (i, 0, 0)),
                pl.BlockSpec((k16, tn), lambda i, j: (0, j)),
            ],
            out_specs=pl.BlockSpec((1, m, tn), lambda i, j: (i, 0, j)),
        ),
        compiler_params=pltpu.CompilerParams(
            dimension_semantics=("parallel", "parallel"),
            vmem_limit_bytes=vmem_limit),
    )(lhs, w_packed)

    out = out[:, :, :cout].astype(jnp.float32).reshape(n, ho, wo, cout)
    return jnp.transpose(out, (0, 3, 1, 2))                    # back to NCHW


# ---------------------------------------------------------------------------
# Pure-JAX f32 reference (semantics check; keeps the bias, which cancels).
# ---------------------------------------------------------------------------
def conv_block_reference(w_oihw, b, x_nchw, eps=1e-5, negative_slope=0.2):
    y = jax.lax.conv_general_dilated(
        x_nchw, w_oihw, window_strides=(2, 2), padding=((1, 1), (1, 1)),
        dimension_numbers=("NCHW", "OIHW", "NCHW"))
    y = y + b[None, :, None, None]
    mean = jnp.mean(y, axis=(2, 3), keepdims=True)
    var = jnp.mean((y - mean) ** 2, axis=(2, 3), keepdims=True)
    y = (y - mean) * jax.lax.rsqrt(var + eps)
    return jnp.where(y > 0.0, y, negative_slope * y)


# ---------------------------------------------------------------------------
if __name__ == "__main__":
    batch, in_channels, out_channels, spatial = 2, 4, 8, 16

    key = jax.random.PRNGKey(0)
    kw_, kb_, kx_ = jax.random.split(key, 3)
    fan_in = in_channels * 4 * 4
    bound = 1.0 / math.sqrt(fan_in)
    w = jax.random.uniform(kw_, (out_channels, in_channels, 4, 4),
                           jnp.float32, -bound, bound)
    b = jax.random.uniform(kb_, (out_channels,), jnp.float32, -bound, bound)
    x = jax.random.uniform(kx_, (batch, in_channels, spatial, spatial),
                           jnp.float32, -1.0, 1.0)

    fwd = jax.jit(functools.partial(conv_block_forward, w, b))
    y = fwd(x)
    jax.block_until_ready(y)

    assert y.shape == (batch, out_channels, spatial // 2, spatial // 2), y.shape
    assert bool(jnp.all(jnp.isfinite(y)))

    # Loose tolerance: MXU operands and the stored output are bf16
    # (f32 accumulation / statistics inside the kernel).
    ref = conv_block_reference(w, b, x)
    max_diff = float(jnp.max(jnp.abs(y - ref)))
    assert max_diff < 1.2e-1, f"max |diff| vs f32 reference = {max_diff}"
    print("KERNEL_OK")
</pallas_src>

<mosaic_0001>
module attributes {stable_mosaic.version = 11 : i64} {
  func.func @_conv_block_kernel(%arg0: i32, %arg1: i32, %arg2: memref<1x64x64xbf16, #tpu.memory_space<vmem>>, %arg3: memref<64x128xbf16, #tpu.memory_space<vmem>>, %arg4: memref<1x64x128xbf16, #tpu.memory_space<vmem>>) attributes {dimension_semantics = [#tpu.dimension_semantics<parallel>, #tpu.dimension_semantics<parallel>], iteration_bounds = array<i64: 2, 1>, scalar_prefetch = 0 : i64, scratch_operands = 0 : i64, tpu.core_type = #tpu.core_type<tc>, window_params = [{transform_indices = @transform_0, window_bounds = array<i64: 1, 64, 64>}, {transform_indices = @transform_1, window_bounds = array<i64: 64, 128>}, {transform_indices = @transform_2, window_bounds = array<i64: 1, 64, 128>}]} {
    %c0 = arith.constant 0 : index
    %c0_0 = arith.constant 0 : index
    %c0_1 = arith.constant 0 : index
    %0 = vector.load %arg2[%c0, %c0_0, %c0_1] : memref<1x64x64xbf16, #tpu.memory_space<vmem>>, vector<1x64x64xbf16>
    %1 = vector.shape_cast %0 : vector<1x64x64xbf16> to vector<64x64xbf16>
    %c0_2 = arith.constant 0 : index
    %c0_3 = arith.constant 0 : index
    %2 = vector.load %arg3[%c0_2, %c0_3] : memref<64x128xbf16, #tpu.memory_space<vmem>>, vector<64x128xbf16>
    %cst = arith.constant dense<0.000000e+00> : vector<64x128xf32>
    %3 = tpu.matmul %1, %2, %cst {dimension_numbers = #tpu.dot_dimension_numbers<[1], [0], [0], [1], [0, 0, 1, 1], [], []>} : vector<64x64xbf16>, vector<64x128xbf16>, vector<64x128xf32> -> vector<64x128xf32>
    %cst_4 = arith.constant dense<0.000000e+00> : vector<128xf32>
    %4 = vector.multi_reduction <add>, %3, %cst_4 [0] : vector<64x128xf32> to vector<128xf32>
    %5 = vector.shape_cast %4 : vector<128xf32> to vector<1x128xf32>
    %cst_5 = arith.constant 1.562500e-02 : f32
    %6 = vector.broadcast %cst_5 : f32 to vector<1x128xf32>
    %7 = arith.mulf %5, %6 : vector<1x128xf32>
    %8 = arith.mulf %3, %3 : vector<64x128xf32>
    %cst_6 = arith.constant dense<0.000000e+00> : vector<128xf32>
    %9 = vector.multi_reduction <add>, %8, %cst_6 [0] : vector<64x128xf32> to vector<128xf32>
    %10 = vector.shape_cast %9 : vector<128xf32> to vector<1x128xf32>
    %cst_7 = arith.constant 1.562500e-02 : f32
    %11 = vector.broadcast %cst_7 : f32 to vector<1x128xf32>
    %12 = arith.mulf %10, %11 : vector<1x128xf32>
    %13 = arith.mulf %7, %7 : vector<1x128xf32>
    %14 = arith.subf %12, %13 : vector<1x128xf32>
    %cst_8 = arith.constant 0.000000e+00 : f32
    %15 = vector.broadcast %cst_8 : f32 to vector<1x128xf32>
    %16 = arith.maximumf %14, %15 : vector<1x128xf32>
    %cst_9 = arith.constant 9.99999974E-6 : f32
    %17 = vector.broadcast %cst_9 : f32 to vector<1x128xf32>
    %18 = arith.addf %16, %17 : vector<1x128xf32>
    %19 = math.rsqrt %18 : vector<1x128xf32>
    %cst_10 = arith.constant 0.000000e+00 : f32
    %20 = vector.broadcast %cst_10 : f32 to vector<1x128xf32>
    %21 = arith.subf %20, %7 : vector<1x128xf32>
    %22 = arith.mulf %21, %19 : vector<1x128xf32>
    %23 = vector.broadcast %19 : vector<1x128xf32> to vector<64x128xf32>
    %24 = arith.mulf %3, %23 : vector<64x128xf32>
    %25 = vector.broadcast %22 : vector<1x128xf32> to vector<64x128xf32>
    %26 = arith.addf %24, %25 : vector<64x128xf32>
    %cst_11 = arith.constant 2.000000e-01 : f32
    %27 = vector.broadcast %cst_11 : f32 to vector<64x128xf32>
    %28 = arith.mulf %27, %26 : vector<64x128xf32>
    %29 = arith.maximumf %26, %28 : vector<64x128xf32>
    %30 = arith.truncf %29 : vector<64x128xf32> to vector<64x128xbf16>
    %c0_12 = arith.constant 0 : index
    %c0_13 = arith.constant 0 : index
    %c0_14 = arith.constant 0 : index
    %31 = vector.load %arg4[%c0_12, %c0_13, %c0_14] : memref<1x64x128xbf16, #tpu.memory_space<vmem>>, vector<1x64x128xbf16>
    %32 = vector.shape_cast %31 : vector<1x64x128xbf16> to vector<64x128xbf16>
    %33 = vector.shape_cast %30 : vector<64x128xbf16> to vector<1x64x128xbf16>
    tpu.vector_store %arg4[%c0_12, %c0_13, %c0_14], %33 {strides = array<i32>} : memref<1x64x128xbf16, #tpu.memory_space<vmem>>, vector<1x64x128xbf16>,
    return
  }
  func.func @transform_0(%arg0: i32, %arg1: i32) -> (i32, i32, i32) {
    %c0_i32 = arith.constant 0 : i32
    %c0_i32_0 = arith.constant 0 : i32
    %c0_i32_1 = arith.constant 0 : i32
    return %arg0, %c0_i32, %c0_i32_0 : i32, i32, i32
  }
  func.func @transform_1(%arg0: i32, %arg1: i32) -> (i32, i32) {
    %c0_i32 = arith.constant 0 : i32
    %c0_i32_0 = arith.constant 0 : i32
    return %c0_i32, %arg1 : i32, i32
  }
  func.func @transform_2(%arg0: i32, %arg1: i32) -> (i32, i32, i32) {
    %c0_i32 = arith.constant 0 : i32
    %c0_i32_0 = arith.constant 0 : i32
    return %arg0, %c0_i32, %arg1 : i32, i32, i32
  }
}

</mosaic_0001>

<llo_original>
// kernel: conv_block_forward.1
$region0: #{conv_block_forward.1}
  #allocation0 [shape = 'u32[]', space=smem, size = 0x4, offset = 0x4, fixed_abs, tag = 'smem constant byte address 0x4 - core index']
  #allocation1 [shape = 'u32[144,128]{1,0:T(1,128)}', space=vmem, size = 0x12000, scoped, tag = 'internal scratch']
  %s0 = inlined_call_operand.vmem [shape: bf16[2,64,64], index: 0, kind: input, shape index: {}]
  %s1 = inlined_call_operand.vmem [shape: bf16[64,128], index: 1, kind: input, shape index: {}]
  %s2 = inlined_call_operand.vmem [shape: bf16[2,64,128], index: 2, kind: output, shape index: {}]
  %s3 = sld [smem:[#allocation0]]
  $region41: #{conv_block_forward.1} parent=0
    _
  %s5 = ssub.s32 1, %s3
  %s6 = scalar_select 0, %s5, %s3
  loop: start=0, step=1, limit=4
  $region2: #{conv_block_forward.1} parent=0 // loop_pre_header
    _
  $region3: #{conv_block_forward.1} parent=0 // loop_header
    %s8 = sphi 0, %s12
    %p9 = scmp.ge.s32.totalorder %s8, 4
    %s15 = sphi 0, %s27
    %s16 = sphi 0, %s23
    %s17 = sphi 0, %s15
    %s18 = sphi 0, %s16
    %s19 = sphi 0, %s17
    %s20 = sphi 0, %s18
    %s30 = sphi 0, %s32
    %s33 = sphi 0, %s30
    %s34 = sphi 0, %s33
    %s50 = sphi 0, %s34
    %s56 = sphi 0, %s58
    %s59 = sphi 0, %s56
    %s60 = sphi 0, %s59
    %s76 = sphi 0, %s60
    %s84 = sphi 0, %s86
    %s87 = sphi 0, %s84
    %s88 = sphi 0, %s87
    %s104 = sphi 0, %s88
  $region4: #{conv_block_forward.1} parent=0 // loop_header_branch
    %11 = sbr.rel (%p9) target = $region8
  $region5: #{conv_block_forward.1} parent=0 // loop_body
    %s13 = ssub.s32 %s8, 1
    %s14 = ssub.s32 %s8, 2
    %s21 = sadd.s32 1, %s16
    %p22 = scmp.ge.s32.totalorder %s21, 1
    %s23 = scalar_select %p22, 0, %s21
    %s24 = sadd.s32 1, %s15
    %s25 = scalar_select %p22, %s24, %s15
    %p26 = scmp.ge.s32.totalorder %s25, 2
    %s27 = scalar_select %p26, 0, %s25
    %s28 = ssub.s32 %s15, %s27
    %p29 = scmp.eq.s32.totalorder %s28, 0
    %s31 = sadd.s32 %s30, 1
    %s32 = scalar_select %p29, %s30, %s31
    %p35 = pneg %p29
    %p36 = scmp.eq.s32.totalorder %s8, 1
    %p37 = por %p35, %p36
    %p38 = scmp.ne.s32.totalorder %s30, %s33
    %p39 = scmp.eq.s32.totalorder %s8, 0
    %p40 = por %p38, %p39
    %p41 = scmp.ne.s32.totalorder %s30, %s33
    %p42 = scmp.eq.s32.totalorder %s13, 1
    %p43 = por %p41, %p42
    %p44 = scmp.ne.s32.totalorder %s33, %s34
    %p45 = scmp.eq.s32.totalorder %s13, 0
    %p46 = por %p44, %p45
    %p47 = scmp.ne.s32.totalorder %s33, %s34
    %p48 = scmp.eq.s32.totalorder %s14, 1
    %p49 = por %p47, %p48
    %p51 = scmp.ne.s32.totalorder %s34, %s50
    %p52 = scmp.eq.s32.totalorder %s14, 0
    %p53 = por %p51, %p52
    %s54 = ssub.s32 %s16, %s23
    %p55 = scmp.eq.s32.totalorder %s54, 0
    %s57 = sadd.s32 %s56, 1
    %s58 = scalar_select %p55, %s56, %s57
    %p61 = pneg %p55
    %p62 = scmp.eq.s32.totalorder %s8, 1
    %p63 = por %p61, %p62
    %p64 = scmp.ne.s32.totalorder %s56, %s59
    %p65 = scmp.eq.s32.totalorder %s8, 0
    %p66 = por %p64, %p65
    %p67 = scmp.ne.s32.totalorder %s56, %s59
    %p68 = scmp.eq.s32.totalorder %s13, 1
    %p69 = por %p67, %p68
    %p70 = scmp.ne.s32.totalorder %s59, %s60
    %p71 = scmp.eq.s32.totalorder %s13, 0
    %p72 = por %p70, %p71
    %p73 = scmp.ne.s32.totalorder %s59, %s60
    %p74 = scmp.eq.s32.totalorder %s14, 1
    %p75 = por %p73, %p74
    %p77 = scmp.ne.s32.totalorder %s60, %s76
    %p78 = scmp.eq.s32.totalorder %s14, 0
    %p79 = por %p77, %p78
    %s80 = ssub.s32 %s15, %s27
    %s81 = ssub.s32 %s16, %s23
    %s82 = sor.u32 %s80, %s81
    %p83 = scmp.eq.s32.totalorder %s82, 0
    %s85 = sadd.s32 %s84, 1
    %s86 = scalar_select %p83, %s84, %s85
    %p89 = pneg %p83
    %p90 = scmp.eq.s32.totalorder %s8, 1
    %p91 = por %p89, %p90
    %p92 = scmp.ne.s32.totalorder %s84, %s87
    %p93 = scmp.eq.s32.totalorder %s8, 0
    %p94 = por %p92, %p93
    %p95 = scmp.ne.s32.totalorder %s84, %s87
    %p96 = scmp.eq.s32.totalorder %s13, 1
    %p97 = por %p95, %p96
    %p98 = scmp.ne.s32.totalorder %s87, %s88
    %p99 = scmp.eq.s32.totalorder %s13, 0
    %p100 = por %p98, %p99
    %p101 = scmp.ne.s32.totalorder %s87, %s88
    %p102 = scmp.eq.s32.totalorder %s14, 1
    %p103 = por %p101, %p102
    %p105 = scmp.ne.s32.totalorder %s88, %s104
    %p106 = scmp.eq.s32.totalorder %s14, 0
    %p107 = por %p105, %p106
    %p108 = scmp.le.s32.totalorder 1, %s8
    %p109 = scmp.lt.s32.totalorder %s8, 3
    %p110 = pnand %p108, %p109
    %p111 = pneg %p110
    // Predicated region
    $region9: #{conv_block_forward.1} parent=5 // pred_check
      _
    $region10: #{conv_block_forward.1} parent=5 // pred_check_branch
      %113 = sbr.rel (%p110) target = $region12
    $region11: #{conv_block_forward.1} parent=5 // pred_region
      %s114 = ssub.s32 %s8, 1
      // Predicated region
      $region13: #{conv_block_forward.1} parent=11 // pred_check
        %p115 = pneg %p72
      $region14: #{conv_block_forward.1} parent=11 // pred_check_branch
        %117 = sbr.rel (%p115) target = $region16
      $region15: #{conv_block_forward.1} parent=11 // pred_region
        %p118 = scmp.lt.s32.totalorder %s18, 0
        %s119 = scalar_select %p118, %s18, 0
        %s120 = smul.addr %s119, 4
        %s121 = scalar_lea.vmem %s1, %s120
      $region16: #{conv_block_forward.1} parent=11 // pred_fallthru
        _
    $region12: #{conv_block_forward.1} parent=5 // pred_fallthru
      _
    %p122 = scmp.lt.s32.totalorder %s8, 2
    // Predicated region
    $region17: #{conv_block_forward.1} parent=5 // pred_check
      %p123 = pneg %p122
    $region18: #{conv_block_forward.1} parent=5 // pred_check_branch
      %125 = sbr.rel (%p123) target = $region20
    $region19: #{conv_block_forward.1} parent=5 // pred_region
      // Predicated region
      $region21: #{conv_block_forward.1} parent=19 // pred_check
        %p126 = pneg %p40
      $region22: #{conv_block_forward.1} parent=19 // pred_check_branch
        %128 = sbr.rel (%p126) target = $region24
      $region23: #{conv_block_forward.1} parent=19 // pred_region
        %p129 = scmp.lt.s32.totalorder %s15, 1
        %s130 = scalar_select %p129, %s15, 1
        %s131 = smul.addr %s130, 8
        %s132 = smul.addr %s131, 4
        %s133 = scalar_lea.vmem %s0, %s132
      $region24: #{conv_block_forward.1} parent=19 // pred_fallthru
        _
    $region20: #{conv_block_forward.1} parent=5 // pred_fallthru
      _
    %p134 = scmp.le.s32.totalorder 1, %s8
    %p135 = scmp.lt.s32.totalorder %s8, 3
    %p136 = pnand %p134, %p135
    %p137 = pneg %p136
    // Predicated region
    $region25: #{conv_block_forward.1} parent=5 // pred_check
      _
    $region26: #{conv_block_forward.1} parent=5 // pred_check_branch
      %139 = sbr.rel (%p136) target = $region28
    $region27: #{conv_block_forward.1} parent=5 // pred_region
      %s140 = ssub.s32 %s8, 1
      %p141 = scmp.lt.s32.totalorder %s17, 1
      %s142 = scalar_select %p141, %s17, 1
      %s143 = smul.addr %s142, 8
      %s144 = smul.addr %s143, 4
      %s145 = scalar_lea.vmem %s0, %s144
      %p146 = pneg %p46
      %p147 = pneg %p43
      %p148 = scmp.lt.s32.totalorder %s18, 0
      %s149 = scalar_select %p148, %s18, 0
      %s150 = smul.addr %s149, 4
      %s151 = scalar_lea.vmem %s1, %s150
      %p152 = pneg %p72
      %p153 = pneg %p69
      %p154 = pneg %p100
      %p155 = pneg %p97
      %p156 = scmp.lt.s32.totalorder %s17, 1
      %s157 = scalar_select %p156, %s17, 1
      %p158 = scmp.lt.s32.totalorder %s18, 0
      %s159 = scalar_select %p158, %s18, 0
      %s160 = smul.addr %s157, 8
      %s161 = sadd.s32 %s159, %s160
      %s162 = smul.addr %s161, 4
      %s163 = scalar_lea.vmem %s2, %s162
      %p164 = scmp.lt.s32.totalorder %s17, 1
      %s165 = scalar_select %p164, %s17, 1
      %s166 = smul.addr %s165, 8
      %s167 = smul.addr %s166, 4
      %s168 = scalar_lea.vmem %s0, %s167
      %p169 = scmp.lt.s32.totalorder %s18, 0
      %s170 = scalar_select %p169, %s18, 0
      %s171 = smul.addr %s170, 4
      %s172 = scalar_lea.vmem %s1, %s171
      %p173 = scmp.lt.s32.totalorder %s17, 1
      %s174 = scalar_select %p173, %s17, 1
      %p175 = scmp.lt.s32.totalorder %s18, 0
      %s176 = scalar_select %p175, %s18, 0
      %s177 = smul.addr %s174, 8
      %s178 = sadd.s32 %s176, %s177
      %s179 = smul.addr %s178, 4
      %s180 = scalar_lea.vmem %s2, %s179
      %v182 = vld [vmem:[%s168] sm:$0xf]
      %v183 = vld [vmem:[%s168 + $0x4] sm:$0xf]
      %v184 = vld [vmem:[%s168 + $0x8] sm:$0xf]
      %v185 = vld [vmem:[%s168 + $0xc] sm:$0xf]
      %v186 = vld [vmem:[%s168 + $0x10] sm:$0xf]
      %v187 = vld [vmem:[%s168 + $0x14] sm:$0xf]
      %v188 = vld [vmem:[%s168 + $0x18] sm:$0xf]
      %v189 = vld [vmem:[%s168 + $0x1c] sm:$0xf]
      %v190 = vld [vmem:[%s172] sm:$0xf]
      %v191 = vld [vmem:[%s172 + $0x4] sm:$0xf]
      %v192 = vld [vmem:[%s172 + $0x8] sm:$0xf]
      %v193 = vld [vmem:[%s172 + $0xc] sm:$0xf]
      %v194 = vld [vmem:[%s172 + $0x10] sm:$0xf]
      %v195 = vld [vmem:[%s172 + $0x14] sm:$0xf]
      %v196 = vld [vmem:[%s172 + $0x18] sm:$0xf]
      %v197 = vld [vmem:[%s172 + $0x1c] sm:$0xf]
      %v206 = vunpack.c.l.b16 %v182
      %v207 = vunpack.c.l.b16 %v183
      %v208 = vunpack.c.l.b16 %v184
      %v209 = vunpack.c.l.b16 %v185
      %v210 = vunpack.c.l.b16 %v186
      %v211 = vunpack.c.l.b16 %v187
      %v212 = vunpack.c.l.b16 %v188
      %v213 = vunpack.c.l.b16 %v189
      %v214 = vpack.c.b16 %v207, %v206
      %v215 = vpack.c.b16 %v209, %v208
      %v216 = vpack.c.b16 %v211, %v210
      %v217 = vpack.c.b16 %v213, %v212
      %v226 = vunpack.c.l.b16 %v190
      %v227 = vunpack.c.l.b16 %v191
      %v228 = vunpack.c.l.b16 %v192
      %v229 = vunpack.c.l.b16 %v193
      %v230 = vunpack.c.l.b16 %v194
      %v231 = vunpack.c.l.b16 %v195
      %v232 = vunpack.c.l.b16 %v196
      %v233 = vunpack.c.l.b16 %v197
      %v234 = vpack.c.b16 %v227, %v226
      %v235 = vpack.c.b16 %v229, %v228
      %v236 = vpack.c.b16 %v231, %v230
      %v237 = vpack.c.b16 %v233, %v232
      %vm242 = vcmask 523264
      %v244 = vsel %vm242, %v214, 0
      %v247 = vsel %vm242, %v215, 0
      %v250 = vsel %vm242, %v216, 0
      %v253 = vsel %vm242, %v217, 0
      %255 = vmatprep.subr.bf16.mxu0 0
      %256 = vmatpush1.bf16.msra.mxu0 %v234
      %257 = vmatprep.subr.bf16.mxu0 0
      %258 = vmatpush1.bf16.msra.mxu0 %v235
      %259 = vmatprep.subr.bf16.mxu0 0
      %260 = vmatpush1.bf16.msra.mxu0 %v236
      %261 = vmatprep.subr.bf16.mxu0 0
      %262 = vmatpush1.bf16.msra.mxu0 %v237
      %263 = vmatprep.subr.bf16.mxu0 0
      %264 = vmatpush1.bf16.msra.mxu0 0
      %265 = vmatprep.subr.bf16.mxu0 0
      %266 = vmatpush1.bf16.msra.mxu0 0
      %267 = vmatprep.subr.bf16.mxu0 0
      %268 = vmatpush1.bf16.msra.mxu0 0
      %269 = vmatprep.subr.bf16.mxu0 0
      %270 = vmatpush1.bf16.msra.mxu0 0
      %271 = vmatprep.subr.bf16.mxu0 0
      %272 = vmatpush1.bf16.msra.mxu0 0
      %273 = vmatprep.subr.bf16.mxu0 0
      %274 = vmatpush1.bf16.msra.mxu0 0
      %275 = vmatprep.subr.bf16.mxu0 0
      %276 = vmatpush1.bf16.msra.mxu0 0
      %277 = vmatprep.subr.bf16.mxu0 0
      %278 = vmatpush1.bf16.msra.mxu0 0
      %279 = vmatprep.subr.bf16.mxu0 0
      %280 = vmatpush1.bf16.msra.mxu0 0
      %281 = vmatprep.subr.bf16.mxu0 0
      %282 = vmatpush1.bf16.msra.mxu0 0
      %283 = vmatprep.subr.bf16.mxu0 0
      %284 = vmatpush1.bf16.msra.mxu0 0
      %285 = vmatprep.subr.bf16.mxu0 0
      %286 = vmatpush1.bf16.msra.mxu0 0
      %287 = vmatprep.mubr.bf16.mxu0 0
      %288 = vmatmul.mubr.bf16.gmra.mrb[0].mxu0 %v244
      %v289 = vpop.f32.mrb[0].mxu0
      %v290 = vadd.f32 0.0, %v289
      %v291 = vpop.f32.mrb[0].mxu0
      %v292 = vpop.f32.mrb[0].mxu0
      %v293 = vadd.f32 0.0, %v292
      %v294 = vpop.f32.mrb[0].mxu0
      %295 = vmatprep.mubr.bf16.mxu0 0
      %296 = vmatmul.mubr.bf16.gmra.mrb[0].mxu0 %v247
      %v297 = vpop.f32.mrb[0].mxu0
      %v298 = vadd.f32 0.0, %v297
      %v299 = vpop.f32.mrb[0].mxu0
      %v300 = vpop.f32.mrb[0].mxu0
      %v301 = vadd.f32 0.0, %v300
      %v302 = vpop.f32.mrb[0].mxu0
      %303 = vmatprep.mubr.bf16.mxu0 0
      %304 = vmatmul.mubr.bf16.gmra.mrb[0].mxu0 %v250
      %v305 = vpop.f32.mrb[0].mxu0
      %v306 = vadd.f32 0.0, %v305
      %v307 = vpop.f32.mrb[0].mxu0
      %v308 = vpop.f32.mrb[0].mxu0
      %v309 = vadd.f32 0.0, %v308
      %v310 = vpop.f32.mrb[0].mxu0
      %311 = vmatprep.mubr.bf16.mxu0 0
      %312 = vmatmul.mubr.bf16.gmra.mrb[0].mxu0 %v253
      %v313 = vpop.f32.mrb[0].mxu0
      %v314 = vadd.f32 0.0, %v313
      %v315 = vpop.f32.mrb[0].mxu0
      %v316 = vpop.f32.mrb[0].mxu0
      %v317 = vadd.f32 0.0, %v316
      %v318 = vpop.f32.mrb[0].mxu0
      %319 = vdwg.mxu0
      %v320 = vadd.f32 %v290, %v293
      %v321 = vadd.f32 %v320, %v298
      %v322 = vadd.f32 %v321, %v301
      %v323 = vadd.f32 %v322, %v306
      %v324 = vadd.f32 %v323, %v309
      %v325 = vadd.f32 %v324, %v314
      %v326 = vadd.f32 %v325, %v317
      %v327 = vrot.slane %v326, 4
      %v328 = vadd.f32 %v326, %v327
      %v329 = vrot.slane %v328, 2
      %v330 = vadd.f32 %v328, %v329
      %v331 = vrot.slane %v330, 1
      %v332 = vadd.f32 %v330, %v331
      %v333 = vmul.f32 %v332, 0.015625
      %v334 = vmul.f32 %v290, %v290
      %v335 = vmul.f32 %v293, %v293
      %v336 = vmul.f32 %v298, %v298
      %v337 = vmul.f32 %v301, %v301
      %v338 = vmul.f32 %v306, %v306
      %v339 = vmul.f32 %v309, %v309
      %v340 = vmul.f32 %v314, %v314
      %v341 = vmul.f32 %v317, %v317
      %v342 = vadd.f32 %v334, %v335
      %v343 = vadd.f32 %v342, %v336
      %v344 = vadd.f32 %v343, %v337
      %v345 = vadd.f32 %v344, %v338
      %v346 = vadd.f32 %v345, %v339
      %v347 = vadd.f32 %v346, %v340
      %v348 = vadd.f32 %v347, %v341
      %v349 = vrot.slane %v348, 4
      %v350 = vadd.f32 %v348, %v349
      %v351 = vrot.slane %v350, 2
      %v352 = vadd.f32 %v350, %v351
      %v353 = vrot.slane %v352, 1
      %v354 = vadd.f32 %v352, %v353
      %v355 = vmul.f32 %v354, 0.015625
      %v356 = vmul.f32 %v333, %v333
      %v357 = vsub.f32 %v355, %v356
      %v358 = vmax.f32 %v357, 0.0
      %v359 = vadd.f32 %v358, 1e-05
      %v360 = vrsqrt.pop %v359
      %v361 = vsub.f32 0.0, %v333
      %v362 = vmul.f32 %v361, %v360
      %v363 = vmul.f32 %v290, %v360
      %v364 = vmul.f32 %v293, %v360
      %v365 = vmul.f32 %v298, %v360
      %v366 = vmul.f32 %v301, %v360
      %v367 = vmul.f32 %v306, %v360
      %v368 = vmul.f32 %v309, %v360
      %v369 = vmul.f32 %v314, %v360
      %v370 = vmul.f32 %v317, %v360
      %v371 = vadd.f32 %v363, %v362
      %v372 = vadd.f32 %v364, %v362
      %v373 = vadd.f32 %v365, %v362
      %v374 = vadd.f32 %v366, %v362
      %v375 = vadd.f32 %v367, %v362
      %v376 = vadd.f32 %v368, %v362
      %v377 = vadd.f32 %v369, %v362
      %v378 = vadd.f32 %v370, %v362
      %v379 = vmul.f32 %v371, 0.2
      %v380 = vmul.f32 %v372, 0.2
      %v381 = vmul.f32 %v373, 0.2
      %v382 = vmul.f32 %v374, 0.2
      %v383 = vmul.f32 %v375, 0.2
      %v384 = vmul.f32 %v376, 0.2
      %v385 = vmul.f32 %v377, 0.2
      %v386 = vmul.f32 %v378, 0.2
      %v387 = vmax.f32 %v371, %v379
      %v388 = vmax.f32 %v372, %v380
      %v389 = vmax.f32 %v373, %v381
      %v390 = vmax.f32 %v374, %v382
      %v391 = vmax.f32 %v375, %v383
      %v392 = vmax.f32 %v376, %v384
      %v393 = vmax.f32 %v377, %v385
      %v394 = vmax.f32 %v378, %v386
      %v395 = vpack.c.bf16 %v388, %v387
      %v396 = vpack.c.bf16 %v390, %v389
      %v397 = vpack.c.bf16 %v392, %v391
      %v398 = vpack.c.bf16 %v394, %v393
      %v403 = vunpack.c.l.b16 %v395
      %v404 = vunpack.c.h.b16 %v395
      %v405 = vunpack.c.l.b16 %v396
      %v406 = vunpack.c.h.b16 %v396
      %v407 = vunpack.c.l.b16 %v397
      %v408 = vunpack.c.h.b16 %v397
      %v409 = vunpack.c.l.b16 %v398
      %v410 = vunpack.c.h.b16 %v398
      %v411 = vpack.c.b16 %v403, %v403
      %v412 = vpack.c.b16 %v404, %v404
      %v413 = vpack.c.b16 %v405, %v405
      %v414 = vpack.c.b16 %v406, %v406
      %v415 = vpack.c.b16 %v407, %v407
      %v416 = vpack.c.b16 %v408, %v408
      %v417 = vpack.c.b16 %v409, %v409
      %v418 = vpack.c.b16 %v410, %v410
      %427 = vst [vmem:[%s180] sm:$0xf] %v411
      %428 = vst [vmem:[%s180 + $0x4] sm:$0xf] %v412
      %429 = vst [vmem:[%s180 + $0x8] sm:$0xf] %v413
      %430 = vst [vmem:[%s180 + $0xc] sm:$0xf] %v414
      %431 = vst [vmem:[%s180 + $0x10] sm:$0xf] %v415
      %432 = vst [vmem:[%s180 + $0x14] sm:$0xf] %v416
      %433 = vst [vmem:[%s180 + $0x18] sm:$0xf] %v417
      %434 = vst [vmem:[%s180 + $0x1c] sm:$0xf] %v418
      %p435 = scmp.lt.s32.totalorder %s17, 1
      %s436 = scalar_select %p435, %s17, 1
      %p437 = scmp.lt.s32.totalorder %s18, 0
      %s438 = scalar_select %p437, %s18, 0
      %s439 = smul.addr %s436, 8
      %s440 = sadd.s32 %s438, %s439
      %s441 = smul.addr %s440, 4
      %s442 = scalar_lea.vmem %s2, %s441
      // Predicated region
      $region29: #{conv_block_forward.1} parent=27 // pred_check
        %p443 = pneg %p97
      $region30: #{conv_block_forward.1} parent=27 // pred_check_branch
        %445 = sbr.rel (%p443) target = $region32
      $region31: #{conv_block_forward.1} parent=27 // pred_region
        _
      $region32: #{conv_block_forward.1} parent=27 // pred_fallthru
        _
    $region28: #{conv_block_forward.1} parent=5 // pred_fallthru
      _
    %p446 = scmp.le.s32.totalorder 2, %s8
    // Predicated region
    $region33: #{conv_block_forward.1} parent=5 // pred_check
      %p447 = pneg %p446
    $region34: #{conv_block_forward.1} parent=5 // pred_check_branch
      %449 = sbr.rel (%p447) target = $region36
    $region35: #{conv_block_forward.1} parent=5 // pred_region
      %s450 = ssub.s32 %s8, 2
      // Predicated region
      $region37: #{conv_block_forward.1} parent=35 // pred_check
        %p451 = pneg %p103
      $region38: #{conv_block_forward.1} parent=35 // pred_check_branch
        %453 = sbr.rel (%p451) target = $region40
      $region39: #{conv_block_forward.1} parent=35 // pred_region
        %p454 = scmp.lt.s32.totalorder %s19, 1
        %s455 = scalar_select %p454, %s19, 1
        %p456 = scmp.lt.s32.totalorder %s20, 0
        %s457 = scalar_select %p456, %s20, 0
        %s458 = smul.addr %s455, 8
        %s459 = sadd.s32 %s457, %s458
        %s460 = smul.addr %s459, 4
        %s461 = scalar_lea.vmem %s2, %s460
      $region40: #{conv_block_forward.1} parent=35 // pred_fallthru
        _
    $region36: #{conv_block_forward.1} parent=5 // pred_fallthru
      _
  $region6: #{conv_block_forward.1} parent=0 // loop_footer
    %s12 = sadd.s32 1, %s8
  $region7: #{conv_block_forward.1} parent=0 // loop_footer_branch
    %7 = sbr.rel target = $region3
  $region8: #{conv_block_forward.1} parent=0 // loop_exit
    _

</llo_original>
